<compile_context>
chip_gen: v7x
topology: tpu7x:2x2x1
jax: 0.10.0
libtpu: 0.0.40
codegen_flags: <defaults>
</compile_context>

<pallas_src>
import jax
import jax.numpy as jnp
from jax.experimental import pallas as pl
from jax.experimental.pallas import tpu as pltpu


def _round_up(n, m):
    return (n + m - 1) // m * m


def _mlp_kernel(x_ref, w1_ref, b1_ref, w2_ref, b2_ref, w3_ref, b3_ref, o_ref):
    # In-kernel cast: x arrives as f32 (single HBM read), MXU inputs are bf16.
    xb = x_ref[...].astype(jnp.bfloat16)
    # fc1 + relu (f32 accumulate, f32 bias/ReLU, then bf16 for the next MXU pass)
    h1 = jnp.dot(xb, w1_ref[...], preferred_element_type=jnp.float32)
    h1 = jnp.maximum(h1 + b1_ref[...], 0.0).astype(jnp.bfloat16)
    # fc2 + relu
    h2 = jnp.dot(h1, w2_ref[...], preferred_element_type=jnp.float32)
    h2 = jnp.maximum(h2 + b2_ref[...], 0.0).astype(jnp.bfloat16)
    # fc3 (no activation), bf16 store
    h3 = jnp.dot(h2, w3_ref[...], preferred_element_type=jnp.float32)
    o_ref[...] = (h3 + b3_ref[...]).astype(o_ref.dtype)


def net_forward(x, packed_params, dims_in, dims_out, *,
                tile_b=2048, out_dtype=jnp.bfloat16):
    """Pallas equivalent of Net.forward. x may have any leading shape; it is
    flattened to (-1, dims_in) exactly like x.view(-1, dims_in)."""
    w1, b1, w2, b2, w3, b3 = packed_params
    x2d = x.reshape(-1, dims_in)                      # glue: view(-1, dims_in)
    B, K = x2d.shape
    F1, F2, OP = w1.shape[1], w2.shape[1], w3.shape[1]

    # Batch tile: multiple of 16 sublanes, capped at tile_b.
    tb = min(tile_b, _round_up(max(B, 1), 16))
    # v7x has 2 TensorCores sharded over "parallel" grid axes: make sure the batch
    # grid has at least 2 steps when the batch is big enough to split.
    if B > 16 and _round_up(B, tb) // tb < 2:
        tb = _round_up(-(-B // 2), 16)                # ceil(B/2) rounded to 16
    Bp = _round_up(B, tb)

    # Pad only the ragged tail (no full pad/cast pass over x; cast happens in-kernel).
    xb = x2d if Bp == B else jnp.pad(x2d, ((0, Bp - B), (0, 0)))

    flops = 2 * Bp * (K * F1 + F1 * F2 + F2 * OP)
    bytes_accessed = (Bp * K * 4                              # x (f32)
                      + (K * F1 + F1 * F2 + F2 * OP) * 2      # weights (bf16)
                      + (F1 + F2 + OP) * 4                    # biases (f32)
                      + Bp * OP * jnp.dtype(out_dtype).itemsize)  # output

    # Weights/biases resident across all grid steps (index_map always block 0).
    resident = lambda shape: pl.BlockSpec(shape, lambda i: (0,) * len(shape))

    cp_kwargs = dict(dimension_semantics=("parallel",))
    if tb > 1024:
        # v5e default scoped VMEM is 16 MiB; footprint at tb=2048 is ~8-9 MiB but
        # leave explicit headroom. Well under v6e (32/128 MiB) and v7x (32/64 MiB).
        cp_kwargs["vmem_limit_bytes"] = 28 * 1024 * 1024

    out = pl.pallas_call(
        _mlp_kernel,
        out_shape=jax.ShapeDtypeStruct((Bp, OP), out_dtype),
        grid=(Bp // tb,),
        in_specs=[
            pl.BlockSpec((tb, K), lambda i: (i, 0)),
            resident(w1.shape), resident(b1.shape),
            resident(w2.shape), resident(b2.shape),
            resident(w3.shape), resident(b3.shape),
        ],
        out_specs=pl.BlockSpec((tb, OP), lambda i: (i, 0)),
        compiler_params=pltpu.CompilerParams(**cp_kwargs),
        cost_estimate=pl.CostEstimate(flops=flops, transcendentals=0,
                                      bytes_accessed=bytes_accessed),
    )(xb, w1, b1, w2, b2, w3, b3)

    return out[:B, :dims_out]


def init_params(key, dims_in, dims_out, dims_fc1=300, dims_fc2=100):
    """Deterministic init mimicking torch.nn.Linear's U(-1/sqrt(fan_in), 1/sqrt(fan_in)).
    Weights stored as (in_features, out_features) so the kernel does x @ W."""
    ks = jax.random.split(key, 6)

    def linear(kw, kb, fan_in, fan_out):
        bound = 1.0 / jnp.sqrt(jnp.float32(fan_in))
        w = jax.random.uniform(kw, (fan_in, fan_out), jnp.float32, -bound, bound)
        b = jax.random.uniform(kb, (1, fan_out), jnp.float32, -bound, bound)
        return w, b

    w1, b1 = linear(ks[0], ks[1], dims_in, dims_fc1)
    w2, b2 = linear(ks[2], ks[3], dims_fc1, dims_fc2)
    w3, b3 = linear(ks[4], ks[5], dims_fc2, dims_out)
    return (w1, b1, w2, b2, w3, b3)


def pack_params(params):
    """Pad feature (output) dims to multiples of 128 (lane-aligned) with zeros and
    cast the weight matrices to bf16 for the MXU. Biases stay f32 (zero-padded).
    The contraction dim of the first layer (dims_in) is intentionally NOT padded."""
    w1, b1, w2, b2, w3, b3 = params
    F1 = _round_up(w1.shape[1], 128)   # 300 -> 384
    F2 = _round_up(w2.shape[1], 128)   # 100 -> 128
    OP = _round_up(w3.shape[1], 128)   # 10  -> 128

    def pad_w(w, rows, cols):
        return jnp.pad(w, ((0, rows - w.shape[0]),
                           (0, cols - w.shape[1]))).astype(jnp.bfloat16)

    def pad_b(b, cols):
        return jnp.pad(b, ((0, 0), (0, cols - b.shape[1]))).astype(jnp.float32)

    w1p, b1p = pad_w(w1, w1.shape[0], F1), pad_b(b1, F1)
    w2p, b2p = pad_w(w2, F1, F2),          pad_b(b2, F2)
    w3p, b3p = pad_w(w3, F2, OP),          pad_b(b3, OP)
    return (w1p, b1p, w2p, b2p, w3p, b3p)


def _reference_bf16(x, packed_params, dims_in, dims_out):
    """Pure-JAX reference using the same bf16-input / f32-accumulate math."""
    w1, b1, w2, b2, w3, b3 = packed_params
    h = x.reshape(-1, dims_in).astype(jnp.bfloat16)
    h = jnp.maximum(jnp.dot(h, w1, preferred_element_type=jnp.float32) + b1, 0.0)
    h = jnp.maximum(jnp.dot(h.astype(jnp.bfloat16), w2,
                            preferred_element_type=jnp.float32) + b2, 0.0)
    h = jnp.dot(h.astype(jnp.bfloat16), w3,
                preferred_element_type=jnp.float32) + b3
    return h[:, :dims_out]


def _reference_f32(x, params, dims_in):
    """Full-precision reference of the original module's math."""
    w1, b1, w2, b2, w3, b3 = params
    h = x.reshape(-1, dims_in)
    h = jnp.maximum(h @ w1 + b1, 0.0)
    h = jnp.maximum(h @ w2 + b2, 0.0)
    return h @ w3 + b3


if __name__ == "__main__":
    dims_in, dims_out = 64, 10
    key = jax.random.PRNGKey(0)
    k_x, k_p = jax.random.split(key)

    params = init_params(k_p, dims_in, dims_out)
    packed = pack_params(params)

    # Small input consistent with x.view(-1, dims_in): (B, 1, 8, 8) with 1*8*8 == dims_in.
    x = jax.random.normal(k_x, (4, 1, 8, 8), dtype=jnp.float32)
    out = jax.block_until_ready(net_forward(x, packed, dims_in, dims_out))
    assert out.shape == (4, dims_out), out.shape

    out_f32 = out.astype(jnp.float32)
    # Check vs. identical bf16/f32-accum math (output is bf16 -> ~1 ulp rounding).
    ref_bf16 = _reference_bf16(x, packed, dims_in, dims_out)
    assert jnp.allclose(out_f32, ref_bf16, atol=2e-2, rtol=2e-2), \
        "mismatch vs. bf16 pure-JAX reference"
    # Loose check vs. the original full-f32 module math (bf16 rounding only).
    ref_f32 = _reference_f32(x, params, dims_in)
    assert jnp.allclose(out_f32, ref_f32, atol=6e-2, rtol=6e-2), \
        "mismatch vs. f32 module reference"

    # Second small case exercising the >=2-step grid + ragged-tail padding path.
    x2 = jax.random.normal(k_x, (100, 64), dtype=jnp.float32)
    out2 = jax.block_until_ready(net_forward(x2, packed, dims_in, dims_out))
    assert out2.shape == (100, dims_out), out2.shape
    ref2 = _reference_bf16(x2, packed, dims_in, dims_out)
    assert jnp.allclose(out2.astype(jnp.float32), ref2, atol=2e-2, rtol=2e-2), \
        "mismatch vs. bf16 pure-JAX reference (multi-step grid)"

    print("KERNEL_OK")
</pallas_src>

<mosaic_0001>
module attributes {stable_mosaic.version = 11 : i64} {
  func.func @_mlp_kernel(%arg0: i32, %arg1: memref<16x64xf32, #tpu.memory_space<vmem>>, %arg2: memref<64x384xbf16, #tpu.memory_space<vmem>>, %arg3: memref<1x384xf32, #tpu.memory_space<vmem>>, %arg4: memref<384x128xbf16, #tpu.memory_space<vmem>>, %arg5: memref<1x128xf32, #tpu.memory_space<vmem>>, %arg6: memref<128x128xbf16, #tpu.memory_space<vmem>>, %arg7: memref<1x128xf32, #tpu.memory_space<vmem>>, %arg8: memref<16x128xbf16, #tpu.memory_space<vmem>>) attributes {dimension_semantics = [#tpu.dimension_semantics<parallel>], iteration_bounds = array<i64: 1>, scalar_prefetch = 0 : i64, scratch_operands = 0 : i64, tpu.core_type = #tpu.core_type<tc>, window_params = [{transform_indices = @transform_0, window_bounds = array<i64: 16, 64>}, {pipeline_mode = #tpu.pipeline_mode<synchronous>, transform_indices = @transform_1, window_bounds = array<i64: 64, 384>}, {pipeline_mode = #tpu.pipeline_mode<synchronous>, transform_indices = @transform_2, window_bounds = array<i64: 1, 384>}, {pipeline_mode = #tpu.pipeline_mode<synchronous>, transform_indices = @transform_3, window_bounds = array<i64: 384, 128>}, {pipeline_mode = #tpu.pipeline_mode<synchronous>, transform_indices = @transform_4, window_bounds = array<i64: 1, 128>}, {pipeline_mode = #tpu.pipeline_mode<synchronous>, transform_indices = @transform_5, window_bounds = array<i64: 128, 128>}, {pipeline_mode = #tpu.pipeline_mode<synchronous>, transform_indices = @transform_6, window_bounds = array<i64: 1, 128>}, {transform_indices = @transform_7, window_bounds = array<i64: 16, 128>}]} {
    %c0 = arith.constant 0 : index
    %c0_0 = arith.constant 0 : index
    %0 = vector.load %arg1[%c0, %c0_0] : memref<16x64xf32, #tpu.memory_space<vmem>>, vector<16x64xf32>
    %1 = arith.truncf %0 : vector<16x64xf32> to vector<16x64xbf16>
    %c0_1 = arith.constant 0 : index
    %c0_2 = arith.constant 0 : index
    %2 = vector.load %arg2[%c0_1, %c0_2] : memref<64x384xbf16, #tpu.memory_space<vmem>>, vector<64x384xbf16>
    %cst = arith.constant dense<0.000000e+00> : vector<16x384xf32>
    %3 = tpu.matmul %1, %2, %cst {dimension_numbers = #tpu.dot_dimension_numbers<[1], [0], [0], [1], [0, 0, 1, 1], [], []>} : vector<16x64xbf16>, vector<64x384xbf16>, vector<16x384xf32> -> vector<16x384xf32>
    %c0_3 = arith.constant 0 : index
    %c0_4 = arith.constant 0 : index
    %4 = vector.load %arg3[%c0_3, %c0_4] : memref<1x384xf32, #tpu.memory_space<vmem>>, vector<1x384xf32>
    %5 = vector.broadcast %4 : vector<1x384xf32> to vector<16x384xf32>
    %6 = arith.addf %3, %5 : vector<16x384xf32>
    %cst_5 = arith.constant 0.000000e+00 : f32
    %7 = vector.broadcast %cst_5 : f32 to vector<16x384xf32>
    %8 = arith.maximumf %6, %7 : vector<16x384xf32>
    %9 = arith.truncf %8 : vector<16x384xf32> to vector<16x384xbf16>
    %c0_6 = arith.constant 0 : index
    %c0_7 = arith.constant 0 : index
    %10 = vector.load %arg4[%c0_6, %c0_7] : memref<384x128xbf16, #tpu.memory_space<vmem>>, vector<384x128xbf16>
    %cst_8 = arith.constant dense<0.000000e+00> : vector<16x128xf32>
    %11 = tpu.matmul %9, %10, %cst_8 {dimension_numbers = #tpu.dot_dimension_numbers<[1], [0], [0], [1], [0, 0, 1, 1], [], []>} : vector<16x384xbf16>, vector<384x128xbf16>, vector<16x128xf32> -> vector<16x128xf32>
    %c0_9 = arith.constant 0 : index
    %c0_10 = arith.constant 0 : index
    %12 = vector.load %arg5[%c0_9, %c0_10] : memref<1x128xf32, #tpu.memory_space<vmem>>, vector<1x128xf32>
    %13 = vector.broadcast %12 : vector<1x128xf32> to vector<16x128xf32>
    %14 = arith.addf %11, %13 : vector<16x128xf32>
    %cst_11 = arith.constant 0.000000e+00 : f32
    %15 = vector.broadcast %cst_11 : f32 to vector<16x128xf32>
    %16 = arith.maximumf %14, %15 : vector<16x128xf32>
    %17 = arith.truncf %16 : vector<16x128xf32> to vector<16x128xbf16>
    %c0_12 = arith.constant 0 : index
    %c0_13 = arith.constant 0 : index
    %18 = vector.load %arg6[%c0_12, %c0_13] : memref<128x128xbf16, #tpu.memory_space<vmem>>, vector<128x128xbf16>
    %cst_14 = arith.constant dense<0.000000e+00> : vector<16x128xf32>
    %19 = tpu.matmul %17, %18, %cst_14 {dimension_numbers = #tpu.dot_dimension_numbers<[1], [0], [0], [1], [0, 0, 1, 1], [], []>} : vector<16x128xbf16>, vector<128x128xbf16>, vector<16x128xf32> -> vector<16x128xf32>
    %c0_15 = arith.constant 0 : index
    %c0_16 = arith.constant 0 : index
    %20 = vector.load %arg7[%c0_15, %c0_16] : memref<1x128xf32, #tpu.memory_space<vmem>>, vector<1x128xf32>
    %21 = vector.broadcast %20 : vector<1x128xf32> to vector<16x128xf32>
    %22 = arith.addf %19, %21 : vector<16x128xf32>
    %23 = arith.truncf %22 : vector<16x128xf32> to vector<16x128xbf16>
    %c0_17 = arith.constant 0 : index
    %c0_18 = arith.constant 0 : index
    %24 = vector.load %arg8[%c0_17, %c0_18] : memref<16x128xbf16, #tpu.memory_space<vmem>>, vector<16x128xbf16>
    tpu.vector_store %arg8[%c0_17, %c0_18], %23 {strides = array<i32>} : memref<16x128xbf16, #tpu.memory_space<vmem>>, vector<16x128xbf16>,
    return
  }
  func.func @transform_0(%arg0: i32) -> (i32, i32) {
    %c0_i32 = arith.constant 0 : i32
    %c0_i32_0 = arith.constant 0 : i32
    return %arg0, %c0_i32 : i32, i32
  }
  func.func @transform_1(%arg0: i32) -> (i32, i32) {
    %c0_i32 = arith.constant 0 : i32
    %c0_i32_0 = arith.constant 0 : i32
    %c0_i32_1 = arith.constant 0 : i32
    return %c0_i32, %c0_i32_0 : i32, i32
  }
  func.func @transform_2(%arg0: i32) -> (i32, i32) {
    %c0_i32 = arith.constant 0 : i32
    %c0_i32_0 = arith.constant 0 : i32
    %c0_i32_1 = arith.constant 0 : i32
    return %c0_i32, %c0_i32_0 : i32, i32
  }
  func.func @transform_3(%arg0: i32) -> (i32, i32) {
    %c0_i32 = arith.constant 0 : i32
    %c0_i32_0 = arith.constant 0 : i32
    %c0_i32_1 = arith.constant 0 : i32
    return %c0_i32, %c0_i32_0 : i32, i32
  }
  func.func @transform_4(%arg0: i32) -> (i32, i32) {
    %c0_i32 = arith.constant 0 : i32
    %c0_i32_0 = arith.constant 0 : i32
    %c0_i32_1 = arith.constant 0 : i32
    return %c0_i32, %c0_i32_0 : i32, i32
  }
  func.func @transform_5(%arg0: i32) -> (i32, i32) {
    %c0_i32 = arith.constant 0 : i32
    %c0_i32_0 = arith.constant 0 : i32
    %c0_i32_1 = arith.constant 0 : i32
    return %c0_i32, %c0_i32_0 : i32, i32
  }
  func.func @transform_6(%arg0: i32) -> (i32, i32) {
    %c0_i32 = arith.constant 0 : i32
    %c0_i32_0 = arith.constant 0 : i32
    %c0_i32_1 = arith.constant 0 : i32
    return %c0_i32, %c0_i32_0 : i32, i32
  }
  func.func @transform_7(%arg0: i32) -> (i32, i32) {
    %c0_i32 = arith.constant 0 : i32
    %c0_i32_0 = arith.constant 0 : i32
    return %arg0, %c0_i32 : i32, i32
  }
}

</mosaic_0001>

<llo_original>
// kernel: tpu_custom_call.1
$region0: #{tpu_custom_call.1}
  #allocation0 [shape = 'u32[]', space=smem, size = 0x4, offset = 0x4, fixed_abs, tag = 'smem constant byte address 0x4 - core index']
  #allocation1 [shape = 'u32[144,128]{1,0:T(1,128)}', space=vmem, size = 0x12000, scoped, tag = 'internal scratch']
  %s0 = inlined_call_operand.hbm [shape: f32[16,64], index: 0, kind: input, shape index: {}]
  %s1 = inlined_call_operand.hbm [shape: bf16[64,384], index: 1, kind: input, shape index: {}]
  %s2 = inlined_call_operand.vmem [shape: f32[1,384], index: 2, kind: input, shape index: {}]
  %s3 = inlined_call_operand.hbm [shape: bf16[384,128], index: 3, kind: input, shape index: {}]
  %s4 = inlined_call_operand.vmem [shape: f32[1,128], index: 4, kind: input, shape index: {}]
  %s5 = inlined_call_operand.hbm [shape: bf16[128,128], index: 5, kind: input, shape index: {}]
  %s6 = inlined_call_operand.vmem [shape: f32[1,128], index: 6, kind: input, shape index: {}]
  %s7 = inlined_call_operand.hbm [shape: bf16[16,128], index: 7, kind: output, shape index: {}]
  %s8 = sld [smem:[#allocation0]]
  $region54: #{tpu_custom_call.1} parent=0
    _
  %s10 = ssub.s32 1, %s8
  %s11 = scalar_select 0, %s10, %s8
  $region1: #{tpu_custom_call.1} parent=0
    #allocation2 [shape = 'u8[8192]{0}', space=vmem, size = 0x2000, scoped, tag = 'input window, operand 0, single buffered']
    #allocation3 [shape = 's32[1]{0}', space=sflag, size = 0x4, scoped, tag = 'scoped memory for tpu_custom_call.1']
    #allocation4 [shape = 's32[1]{0}', space=sflag, size = 0x4, scoped, tag = 'scoped memory for tpu_custom_call.1']
    #allocation5 [shape = 'u8[49152]{0}', space=vmem, size = 0xc000, scoped, tag = 'input window, operand 1, single buffered']
    #allocation6 [shape = 's32[1]{0}', space=sflag, size = 0x4, scoped, tag = 'scoped memory for tpu_custom_call.1']
    #allocation7 [shape = 'u8[98304]{0}', space=vmem, size = 0x18000, scoped, tag = 'input window, operand 3, single buffered']
    #allocation8 [shape = 'u8[32768]{0}', space=vmem, size = 0x8000, scoped, tag = 'input window, operand 5, single buffered']
    #allocation9 [shape = 's32[1]{0}', space=sflag, size = 0x4, scoped, tag = 'scoped memory for tpu_custom_call.1']
    #allocation10 [shape = 'u8[4096]{0}', space=vmem, size = 0x1000, scoped, tag = 'output window, operand 0, single buffered']
    %12 = vsyncpa [#allocation3], 0
    %13 = vsyncpa [#allocation6], 0
    %14 = vsyncpa [#allocation9], 0
    %15 = vsyncpa [#allocation4], 0
    // Predicated region
    $region2: #{tpu_custom_call.1} parent=1 // pred_check
      _
    $region3: #{tpu_custom_call.1} parent=1 // pred_check_branch
      %17 = sbr.rel (0) target = $region5
    $region4: #{tpu_custom_call.1} parent=1 // pred_region
      %s19 = ssub.s32 256, 256
      %20 = vsyncadd [#allocation3], %s19
      %s21 = sshll.u32 [#allocation2], 4
      %s22 = int_to_ptr.vmem [resolvable:$true] %s21
      %27 = dma.hbm_to_vmem [thread:$0]  %s0, 256, %s22, [#allocation3], 128, 128, 8
    $region5: #{tpu_custom_call.1} parent=1 // pred_fallthru
      _
    // Predicated region
    $region6: #{tpu_custom_call.1} parent=1 // pred_check
      _
    $region7: #{tpu_custom_call.1} parent=1 // pred_check_branch
      %29 = sbr.rel (0) target = $region9
    $region8: #{tpu_custom_call.1} parent=1 // pred_region
      %s31 = ssub.s32 1536, 1536
      %32 = vsyncadd [#allocation6], %s31
      %s33 = sshll.u32 [#allocation5], 4
      %s34 = int_to_ptr.vmem [resolvable:$true] %s33
      %39 = dma.hbm_to_vmem [thread:$0]  %s1, 1536, %s34, [#allocation6], 192, 192, 12
    $region9: #{tpu_custom_call.1} parent=1 // pred_fallthru
      _
    // Predicated region
    $region10: #{tpu_custom_call.1} parent=1 // pred_check
      _
    $region11: #{tpu_custom_call.1} parent=1 // pred_check_branch
      %41 = sbr.rel (0) target = $region13
    $region12: #{tpu_custom_call.1} parent=1 // pred_region
      _
    $region13: #{tpu_custom_call.1} parent=1 // pred_fallthru
      _
    // Predicated region
    $region14: #{tpu_custom_call.1} parent=1 // pred_check
      _
    $region15: #{tpu_custom_call.1} parent=1 // pred_check_branch
      %43 = sbr.rel (0) target = $region17
    $region16: #{tpu_custom_call.1} parent=1 // pred_region
      %s45 = ssub.s32 3072, 3072
      %46 = vsyncadd [#allocation6], %s45
      %s47 = sshll.u32 [#allocation7], 4
      %s48 = int_to_ptr.vmem [resolvable:$true] %s47
      %53 = dma.hbm_to_vmem [thread:$0]  %s3, 3072, %s48, [#allocation6], 64, 64, 4
    $region17: #{tpu_custom_call.1} parent=1 // pred_fallthru
      _
    // Predicated region
    $region18: #{tpu_custom_call.1} parent=1 // pred_check
      _
    $region19: #{tpu_custom_call.1} parent=1 // pred_check_branch
      %55 = sbr.rel (0) target = $region21
    $region20: #{tpu_custom_call.1} parent=1 // pred_region
      _
    $region21: #{tpu_custom_call.1} parent=1 // pred_fallthru
      _
    // Predicated region
    $region22: #{tpu_custom_call.1} parent=1 // pred_check
      _
    $region23: #{tpu_custom_call.1} parent=1 // pred_check_branch
      %57 = sbr.rel (0) target = $region25
    $region24: #{tpu_custom_call.1} parent=1 // pred_region
      %s59 = ssub.s32 1024, 1024
      %60 = vsyncadd [#allocation9], %s59
      %s61 = sshll.u32 [#allocation8], 4
      %s62 = int_to_ptr.vmem [resolvable:$true] %s61
      %67 = dma.hbm_to_vmem [thread:$0]  %s5, 1024, %s62, [#allocation9], 64, 64, 4
    $region25: #{tpu_custom_call.1} parent=1 // pred_fallthru
      _
    // Predicated region
    $region26: #{tpu_custom_call.1} parent=1 // pred_check
      _
    $region27: #{tpu_custom_call.1} parent=1 // pred_check_branch
      %69 = sbr.rel (0) target = $region29
    $region28: #{tpu_custom_call.1} parent=1 // pred_region
      _
    $region29: #{tpu_custom_call.1} parent=1 // pred_fallthru
      _
    // Predicated region
    $region30: #{tpu_custom_call.1} parent=1 // pred_check
      _
    $region31: #{tpu_custom_call.1} parent=1 // pred_check_branch
      %71 = sbr.rel (0) target = $region33
    $region32: #{tpu_custom_call.1} parent=1 // pred_region
      %72 = dma.done [#allocation3], 256
    $region33: #{tpu_custom_call.1} parent=1 // pred_fallthru
      _
    // Predicated region
    $region34: #{tpu_custom_call.1} parent=1 // pred_check
      _
    $region35: #{tpu_custom_call.1} parent=1 // pred_check_branch
      %74 = sbr.rel (0) target = $region37
    $region36: #{tpu_custom_call.1} parent=1 // pred_region
      %75 = dma.done [#allocation6], 1536
    $region37: #{tpu_custom_call.1} parent=1 // pred_fallthru
      _
    // Predicated region
    $region38: #{tpu_custom_call.1} parent=1 // pred_check
      _
    $region39: #{tpu_custom_call.1} parent=1 // pred_check_branch
      %77 = sbr.rel (0) target = $region41
    $region40: #{tpu_custom_call.1} parent=1 // pred_region
      %78 = dma.done [#allocation6], 3072
    $region41: #{tpu_custom_call.1} parent=1 // pred_fallthru
      _
    // Predicated region
    $region42: #{tpu_custom_call.1} parent=1 // pred_check
      _
    $region43: #{tpu_custom_call.1} parent=1 // pred_check_branch
      %80 = sbr.rel (0) target = $region45
    $region44: #{tpu_custom_call.1} parent=1 // pred_region
      %81 = dma.done [#allocation9], 1024
    $region45: #{tpu_custom_call.1} parent=1 // pred_fallthru
      _
    %v83 = vld [vmem:[#allocation2] sm:$0xff]
    %v84 = vld [vmem:[#allocation2 + $0x8] sm:$0xff]
    %v85 = vpack.c.bf16 %v84, %v83
    %v86 = vld [vmem:[#allocation5] sm:$0xff]
    %v87 = vld [vmem:[#allocation5 + $0x8] sm:$0xf]
    %v88 = vld [vmem:[#allocation5 + $0xc] sm:$0xff]
    %v89 = vld [vmem:[#allocation5 + $0x14] sm:$0xf]
    %v90 = vld [vmem:[#allocation5 + $0x18] sm:$0xff]
    %v91 = vld [vmem:[#allocation5 + $0x20] sm:$0xf]
    %v92 = vld [vmem:[#allocation5 + $0x24] sm:$0xff]
    %v93 = vld [vmem:[#allocation5 + $0x2c] sm:$0xf]
    %v94 = vld [vmem:[#allocation5 + $0x30] sm:$0xff]
    %v95 = vld [vmem:[#allocation5 + $0x38] sm:$0xf]
    %v96 = vld [vmem:[#allocation5 + $0x3c] sm:$0xff]
    %v97 = vld [vmem:[#allocation5 + $0x44] sm:$0xf]
    %v98 = vld [vmem:[#allocation5 + $0x48] sm:$0xff]
    %v99 = vld [vmem:[#allocation5 + $0x50] sm:$0xf]
    %v100 = vld [vmem:[#allocation5 + $0x54] sm:$0xff]
    %v101 = vld [vmem:[#allocation5 + $0x5c] sm:$0xf]
    %v102 = vld [vmem:[%s2] sm:$0x7]
    %v104 = vlaneseq
    %v105 = vshrl.u32 %v104, 7
    %v106 = vsub.s32 0, %v105
    %v107 = vrot.slane %v102, %v106
    %v108 = vlaneseq
    %v109 = vshrl.u32 %v108, 7
    %v110 = vsub.s32 1, %v109
    %v111 = vrot.slane %v102, %v110
    %v112 = vlaneseq
    %v113 = vshrl.u32 %v112, 7
    %v114 = vsub.s32 2, %v113
    %v115 = vrot.slane %v102, %v114
    %v135 = vunpack.c.l.b16 %v86
    %v136 = vunpack.c.h.b16 %v86
    %v137 = vunpack.c.l.b16 %v87
    %v138 = vunpack.c.l.b16 %v88
    %v139 = vunpack.c.h.b16 %v88
    %v140 = vunpack.c.l.b16 %v89
    %v141 = vunpack.c.l.b16 %v90
    %v142 = vunpack.c.h.b16 %v90
    %v143 = vunpack.c.l.b16 %v91
    %v144 = vunpack.c.l.b16 %v92
    %v145 = vunpack.c.h.b16 %v92
    %v146 = vunpack.c.l.b16 %v93
    %v147 = vunpack.c.l.b16 %v94
    %v148 = vunpack.c.h.b16 %v94
    %v149 = vunpack.c.l.b16 %v95
    %v150 = vunpack.c.l.b16 %v96
    %v151 = vunpack.c.h.b16 %v96
    %v152 = vunpack.c.l.b16 %v97
    %v153 = vunpack.c.l.b16 %v98
    %v154 = vunpack.c.h.b16 %v98
    %v155 = vunpack.c.l.b16 %v99
    %v156 = vunpack.c.l.b16 %v100
    %v157 = vunpack.c.h.b16 %v100
    %v158 = vunpack.c.l.b16 %v101
    %v159 = vpack.c.b16 %v138, %v135
    %v160 = vpack.c.b16 %v139, %v136
    %v161 = vpack.c.b16 %v140, %v137
    %v162 = vpack.c.b16 %v144, %v141
    %v163 = vpack.c.b16 %v145, %v142
    %v164 = vpack.c.b16 %v146, %v143
    %v165 = vpack.c.b16 %v150, %v147
    %v166 = vpack.c.b16 %v151, %v148
    %v167 = vpack.c.b16 %v152, %v149
    %v168 = vpack.c.b16 %v156, %v153
    %v169 = vpack.c.b16 %v157, %v154
    %v170 = vpack.c.b16 %v158, %v155
    %vm183 = vcmask 523264
    %v185 = vsel %vm183, %v85, 0
    %187 = vmatprep.subr.bf16.mxu0 %v160
    %188 = vmatpush1.bf16.msra.mxu0 %v159
    %189 = vmatprep.subr.bf16.mxu0 %v163
    %190 = vmatpush1.bf16.msra.mxu0 %v162
    %191 = vmatprep.subr.bf16.mxu0 %v166
    %192 = vmatpush1.bf16.msra.mxu0 %v165
    %193 = vmatprep.subr.bf16.mxu0 %v169
    %194 = vmatpush1.bf16.msra.mxu0 %v168
    %195 = vmatprep.subr.bf16.mxu0 0
    %196 = vmatpush1.bf16.msra.mxu0 0
    %197 = vmatprep.subr.bf16.mxu0 0
    %198 = vmatpush1.bf16.msra.mxu0 0
    %199 = vmatprep.subr.bf16.mxu0 0
    %200 = vmatpush1.bf16.msra.mxu0 0
    %201 = vmatprep.subr.bf16.mxu0 0
    %202 = vmatpush1.bf16.msra.mxu0 0
    %203 = vmatprep.subr.bf16.mxu0 0
    %204 = vmatpush1.bf16.msra.mxu0 0
    %205 = vmatprep.subr.bf16.mxu0 0
    %206 = vmatpush1.bf16.msra.mxu0 0
    %207 = vmatprep.subr.bf16.mxu0 0
    %208 = vmatpush1.bf16.msra.mxu0 0
    %209 = vmatprep.subr.bf16.mxu0 0
    %210 = vmatpush1.bf16.msra.mxu0 0
    %211 = vmatprep.subr.bf16.mxu0 0
    %212 = vmatpush1.bf16.msra.mxu0 0
    %213 = vmatprep.subr.bf16.mxu0 0
    %214 = vmatpush1.bf16.msra.mxu0 0
    %215 = vmatprep.subr.bf16.mxu0 0
    %216 = vmatpush1.bf16.msra.mxu0 0
    %217 = vmatprep.subr.bf16.mxu0 0
    %218 = vmatpush1.bf16.msra.mxu0 0
    %219 = vmatprep.mubr.bf16.mxu0 0
    %220 = vmatmul.mubr.bf16.gmra.mrb[0].mxu0 %v185
    %v221 = vpop.f32.mrb[0].mxu0
    %v222 = vadd.f32 %v107, %v221
    %v223 = vpop.f32.mrb[0].mxu0
    %v224 = vadd.f32 %v111, %v223
    %v225 = vpop.f32.mrb[0].mxu0
    %v226 = vadd.f32 %v107, %v225
    %v227 = vpop.f32.mrb[0].mxu0
    %v228 = vadd.f32 %v111, %v227
    %229 = vdwg.mxu0
    %230 = vmatprep.subr.bf16.mxu0 0
    %231 = vmatpush1.bf16.msra.mxu0 %v161
    %232 = vmatprep.subr.bf16.mxu0 0
    %233 = vmatpush1.bf16.msra.mxu0 %v164
    %234 = vmatprep.subr.bf16.mxu0 0
    %235 = vmatpush1.bf16.msra.mxu0 %v167
    %236 = vmatprep.subr.bf16.mxu0 0
    %237 = vmatpush1.bf16.msra.mxu0 %v170
    %238 = vmatprep.subr.bf16.mxu0 0
    %239 = vmatpush1.bf16.msra.mxu0 0
    %240 = vmatprep.subr.bf16.mxu0 0
    %241 = vmatpush1.bf16.msra.mxu0 0
    %242 = vmatprep.subr.bf16.mxu0 0
    %243 = vmatpush1.bf16.msra.mxu0 0
    %244 = vmatprep.subr.bf16.mxu0 0
    %245 = vmatpush1.bf16.msra.mxu0 0
    %246 = vmatprep.subr.bf16.mxu0 0
    %247 = vmatpush1.bf16.msra.mxu0 0
    %248 = vmatprep.subr.bf16.mxu0 0
    %249 = vmatpush1.bf16.msra.mxu0 0
    %250 = vmatprep.subr.bf16.mxu0 0
    %251 = vmatpush1.bf16.msra.mxu0 0
    %252 = vmatprep.subr.bf16.mxu0 0
    %253 = vmatpush1.bf16.msra.mxu0 0
    %254 = vmatprep.subr.bf16.mxu0 0
    %255 = vmatpush1.bf16.msra.mxu0 0
    %256 = vmatprep.subr.bf16.mxu0 0
    %257 = vmatpush1.bf16.msra.mxu0 0
    %258 = vmatprep.subr.bf16.mxu0 0
    %259 = vmatpush1.bf16.msra.mxu0 0
    %260 = vmatprep.subr.bf16.mxu0 0
    %261 = vmatpush1.bf16.msra.mxu0 0
    %262 = vmatprep.mubr.bf16.mxu0 0
    %263 = vmatmul.mubr.bf16.gmra.mrb[0].mxu0 %v185
    %v264 = vpop.f32.mrb[0].mxu0
    %v265 = vadd.f32 %v115, %v264
    %v266 = vpop.f32.mrb[0].mxu0
    %v267 = vpop.f32.mrb[0].mxu0
    %v268 = vadd.f32 %v115, %v267
    %v269 = vpop.f32.mrb[0].mxu0
    %270 = vdwg.mxu0
    %v271 = vmax.f32 %v222, 0.0
    %v272 = vmax.f32 %v224, 0.0
    %v273 = vmax.f32 %v265, 0.0
    %v274 = vmax.f32 %v226, 0.0
    %v275 = vmax.f32 %v228, 0.0
    %v276 = vmax.f32 %v268, 0.0
    %v277 = vpack.c.bf16 %v274, %v271
    %v278 = vpack.c.bf16 %v275, %v272
    %v279 = vpack.c.bf16 %v276, %v273
    %v280 = vld [vmem:[#allocation7] sm:$0xf]
    %v281 = vld [vmem:[#allocation7 + $0x4] sm:$0xf]
    %v282 = vld [vmem:[#allocation7 + $0x8] sm:$0xf]
    %v283 = vld [vmem:[#allocation7 + $0xc] sm:$0xf]
    %v284 = vld [vmem:[#allocation7 + $0x10] sm:$0xf]
    %v285 = vld [vmem:[#allocation7 + $0x14] sm:$0xf]
    %v286 = vld [vmem:[#allocation7 + $0x18] sm:$0xf]
    %v287 = vld [vmem:[#allocation7 + $0x1c] sm:$0xf]
    %v288 = vld [vmem:[#allocation7 + $0x20] sm:$0xf]
    %v289 = vld [vmem:[#allocation7 + $0x24] sm:$0xf]
    %v290 = vld [vmem:[#allocation7 + $0x28] sm:$0xf]
    %v291 = vld [vmem:[#allocation7 + $0x2c] sm:$0xf]
    %v292 = vld [vmem:[#allocation7 + $0x30] sm:$0xf]
    %v293 = vld [vmem:[#allocation7 + $0x34] sm:$0xf]
    %v294 = vld [vmem:[#allocation7 + $0x38] sm:$0xf]
    %v295 = vld [vmem:[#allocation7 + $0x3c] sm:$0xf]
    %v296 = vld [vmem:[#allocation7 + $0x40] sm:$0xf]
    %v297 = vld [vmem:[#allocation7 + $0x44] sm:$0xf]
    %v298 = vld [vmem:[#allocation7 + $0x48] sm:$0xf]
    %v299 = vld [vmem:[#allocation7 + $0x4c] sm:$0xf]
    %v300 = vld [vmem:[#allocation7 + $0x50] sm:$0xf]
    %v301 = vld [vmem:[#allocation7 + $0x54] sm:$0xf]
    %v302 = vld [vmem:[#allocation7 + $0x58] sm:$0xf]
    %v303 = vld [vmem:[#allocation7 + $0x5c] sm:$0xf]
    %v304 = vld [vmem:[#allocation7 + $0x60] sm:$0xf]
    %v305 = vld [vmem:[#allocation7 + $0x64] sm:$0xf]
    %v306 = vld [vmem:[#allocation7 + $0x68] sm:$0xf]
    %v307 = vld [vmem:[#allocation7 + $0x6c] sm:$0xf]
    %v308 = vld [vmem:[#allocation7 + $0x70] sm:$0xf]
    %v309 = vld [vmem:[#allocation7 + $0x74] sm:$0xf]
    %v310 = vld [vmem:[#allocation7 + $0x78] sm:$0xf]
    %v311 = vld [vmem:[#allocation7 + $0x7c] sm:$0xf]
    %v312 = vld [vmem:[#allocation7 + $0x80] sm:$0xf]
    %v313 = vld [vmem:[#allocation7 + $0x84] sm:$0xf]
    %v314 = vld [vmem:[#allocation7 + $0x88] sm:$0xf]
    %v315 = vld [vmem:[#allocation7 + $0x8c] sm:$0xf]
    %v316 = vld [vmem:[#allocation7 + $0x90] sm:$0xf]
    %v317 = vld [vmem:[#allocation7 + $0x94] sm:$0xf]
    %v318 = vld [vmem:[#allocation7 + $0x98] sm:$0xf]
    %v319 = vld [vmem:[#allocation7 + $0x9c] sm:$0xf]
    %v320 = vld [vmem:[#allocation7 + $0xa0] sm:$0xf]
    %v321 = vld [vmem:[#allocation7 + $0xa4] sm:$0xf]
    %v322 = vld [vmem:[#allocation7 + $0xa8] sm:$0xf]
    %v323 = vld [vmem:[#allocation7 + $0xac] sm:$0xf]
    %v324 = vld [vmem:[#allocation7 + $0xb0] sm:$0xf]
    %v325 = vld [vmem:[#allocation7 + $0xb4] sm:$0xf]
    %v326 = vld [vmem:[#allocation7 + $0xb8] sm:$0xf]
    %v327 = vld [vmem:[#allocation7 + $0xbc] sm:$0xf]
    %v328 = vld [vmem:[%s4] sm:$0x1]
    %v330 = vlaneseq
    %v331 = vshrl.u32 %v330, 7
    %v332 = vsub.s32 0, %v331
    %v333 = vrot.slane %v328, %v332
    %v383 = vunpack.c.l.b16 %v280
    %v384 = vunpack.c.l.b16 %v281
    %v385 = vunpack.c.l.b16 %v282
    %v386 = vunpack.c.l.b16 %v283
    %v387 = vunpack.c.l.b16 %v284
    %v388 = vunpack.c.l.b16 %v285
    %v389 = vunpack.c.l.b16 %v286
    %v390 = vunpack.c.l.b16 %v287
    %v391 = vunpack.c.l.b16 %v288
    %v392 = vunpack.c.l.b16 %v289
    %v393 = vunpack.c.l.b16 %v290
    %v394 = vunpack.c.l.b16 %v291
    %v395 = vunpack.c.l.b16 %v292
    %v396 = vunpack.c.l.b16 %v293
    %v397 = vunpack.c.l.b16 %v294
    %v398 = vunpack.c.l.b16 %v295
    %v399 = vunpack.c.l.b16 %v296
    %v400 = vunpack.c.l.b16 %v297
    %v401 = vunpack.c.l.b16 %v298
    %v402 = vunpack.c.l.b16 %v299
    %v403 = vunpack.c.l.b16 %v300
    %v404 = vunpack.c.l.b16 %v301
    %v405 = vunpack.c.l.b16 %v302
    %v406 = vunpack.c.l.b16 %v303
    %v407 = vunpack.c.l.b16 %v304
    %v408 = vunpack.c.l.b16 %v305
    %v409 = vunpack.c.l.b16 %v306
    %v410 = vunpack.c.l.b16 %v307
    %v411 = vunpack.c.l.b16 %v308
    %v412 = vunpack.c.l.b16 %v309
    %v413 = vunpack.c.l.b16 %v310
    %v414 = vunpack.c.l.b16 %v311
    %v415 = vunpack.c.l.b16 %v312
    %v416 = vunpack.c.l.b16 %v313
    %v417 = vunpack.c.l.b16 %v314
    %v418 = vunpack.c.l.b16 %v315
    %v419 = vunpack.c.l.b16 %v316
    %v420 = vunpack.c.l.b16 %v317
    %v421 = vunpack.c.l.b16 %v318
    %v422 = vunpack.c.l.b16 %v319
    %v423 = vunpack.c.l.b16 %v320
    %v424 = vunpack.c.l.b16 %v321
    %v425 = vunpack.c.l.b16 %v322
    %v426 = vunpack.c.l.b16 %v323
    %v427 = vunpack.c.l.b16 %v324
    %v428 = vunpack.c.l.b16 %v325
    %v429 = vunpack.c.l.b16 %v326
    %v430 = vunpack.c.l.b16 %v327
    %v431 = vpack.c.b16 %v384, %v383
    %v432 = vpack.c.b16 %v386, %v385
    %v433 = vpack.c.b16 %v388, %v387
    %v434 = vpack.c.b16 %v390, %v389
    %v435 = vpack.c.b16 %v392, %v391
    %v436 = vpack.c.b16 %v394, %v393
    %v437 = vpack.c.b16 %v396, %v395
    %v438 = vpack.c.b16 %v398, %v397
    %v439 = vpack.c.b16 %v400, %v399
    %v440 = vpack.c.b16 %v402, %v401
    %v441 = vpack.c.b16 %v404, %v403
    %v442 = vpack.c.b16 %v406, %v405
    %v443 = vpack.c.b16 %v408, %v407
    %v444 = vpack.c.b16 %v410, %v409
    %v445 = vpack.c.b16 %v412, %v411
    %v446 = vpack.c.b16 %v414, %v413
    %v447 = vpack.c.b16 %v416, %v415
    %v448 = vpack.c.b16 %v418, %v417
    %v449 = vpack.c.b16 %v420, %v419
    %v450 = vpack.c.b16 %v422, %v421
    %v451 = vpack.c.b16 %v424, %v423
    %v452 = vpack.c.b16 %v426, %v425
    %v453 = vpack.c.b16 %v428, %v427
    %v454 = vpack.c.b16 %v430, %v429
    %479 = vmatprep.subr.bf16.mxu0 0
    %480 = vmatpush1.bf16.msra.mxu0 %v431
    %481 = vmatprep.subr.bf16.mxu0 0
    %482 = vmatpush1.bf16.msra.mxu0 %v432
    %483 = vmatprep.subr.bf16.mxu0 0
    %484 = vmatpush1.bf16.msra.mxu0 %v433
    %485 = vmatprep.subr.bf16.mxu0 0
    %486 = vmatpush1.bf16.msra.mxu0 %v434
    %487 = vmatprep.subr.bf16.mxu0 0
    %488 = vmatpush1.bf16.msra.mxu0 %v435
    %489 = vmatprep.subr.bf16.mxu0 0
    %490 = vmatpush1.bf16.msra.mxu0 %v436
    %491 = vmatprep.subr.bf16.mxu0 0
    %492 = vmatpush1.bf16.msra.mxu0 %v437
    %493 = vmatprep.subr.bf16.mxu0 0
    %494 = vmatpush1.bf16.msra.mxu0 %v438
    %495 = vmatprep.subr.bf16.mxu0 0
    %496 = vmatpush1.bf16.msra.mxu0 %v439
    %497 = vmatprep.subr.bf16.mxu0 0
    %498 = vmatpush1.bf16.msra.mxu0 %v440
    %499 = vmatprep.subr.bf16.mxu0 0
    %500 = vmatpush1.bf16.msra.mxu0 %v441
    %501 = vmatprep.subr.bf16.mxu0 0
    %502 = vmatpush1.bf16.msra.mxu0 %v442
    %503 = vmatprep.subr.bf16.mxu0 0
    %504 = vmatpush1.bf16.msra.mxu0 %v443
    %505 = vmatprep.subr.bf16.mxu0 0
    %506 = vmatpush1.bf16.msra.mxu0 %v444
    %507 = vmatprep.subr.bf16.mxu0 0
    %508 = vmatpush1.bf16.msra.mxu0 %v445
    %509 = vmatprep.subr.bf16.mxu0 0
    %510 = vmatpush1.bf16.msra.mxu0 %v446
    %511 = vmatprep.mubr.bf16.mxu0 %v278
    %512 = vmatmul.mubr.bf16.gmra.mrb[0].mxu0 %v277
    %v513 = vpop.f32.mrb[0].mxu0
    %v514 = vadd.f32 %v333, %v513
    %v515 = vpop.f32.mrb[0].mxu0
    %v516 = vpop.f32.mrb[0].mxu0
    %v517 = vadd.f32 %v333, %v516
    %v518 = vpop.f32.mrb[0].mxu0
    %519 = vdwg.mxu0
    %520 = vmatprep.subr.bf16.mxu0 0
    %521 = vmatpush1.bf16.msra.mxu0 %v447
    %522 = vmatprep.subr.bf16.mxu0 0
    %523 = vmatpush1.bf16.msra.mxu0 %v448
    %524 = vmatprep.subr.bf16.mxu0 0
    %525 = vmatpush1.bf16.msra.mxu0 %v449
    %526 = vmatprep.subr.bf16.mxu0 0
    %527 = vmatpush1.bf16.msra.mxu0 %v450
    %528 = vmatprep.subr.bf16.mxu0 0
    %529 = vmatpush1.bf16.msra.mxu0 %v451
    %530 = vmatprep.subr.bf16.mxu0 0
    %531 = vmatpush1.bf16.msra.mxu0 %v452
    %532 = vmatprep.subr.bf16.mxu0 0
    %533 = vmatpush1.bf16.msra.mxu0 %v453
    %534 = vmatprep.subr.bf16.mxu0 0
    %535 = vmatpush1.bf16.msra.mxu0 %v454
    %536 = vmatprep.subr.bf16.mxu0 0
    %537 = vmatpush1.bf16.msra.mxu0 0
    %538 = vmatprep.subr.bf16.mxu0 0
    %539 = vmatpush1.bf16.msra.mxu0 0
    %540 = vmatprep.subr.bf16.mxu0 0
    %541 = vmatpush1.bf16.msra.mxu0 0
    %542 = vmatprep.subr.bf16.mxu0 0
    %543 = vmatpush1.bf16.msra.mxu0 0
    %544 = vmatprep.subr.bf16.mxu0 0
    %545 = vmatpush1.bf16.msra.mxu0 0
    %546 = vmatprep.subr.bf16.mxu0 0
    %547 = vmatpush1.bf16.msra.mxu0 0
    %548 = vmatprep.subr.bf16.mxu0 0
    %549 = vmatpush1.bf16.msra.mxu0 0
    %550 = vmatprep.subr.bf16.mxu0 0
    %551 = vmatpush1.bf16.msra.mxu0 0
    %552 = vmatprep.mubr.bf16.mxu0 0
    %553 = vmatmul.mubr.bf16.gmra.mrb[0].mxu0 %v279
    %v554 = vpop.f32.mrb[0].mxu0
    %v555 = vadd.f32 %v514, %v554
    %v556 = vpop.f32.mrb[0].mxu0
    %v557 = vpop.f32.mrb[0].mxu0
    %v558 = vadd.f32 %v517, %v557
    %v559 = vpop.f32.mrb[0].mxu0
    %560 = vdwg.mxu0
    %v561 = vmax.f32 %v555, 0.0
    %v562 = vmax.f32 %v558, 0.0
    %v563 = vpack.c.bf16 %v562, %v561
    %v564 = vld [vmem:[#allocation8] sm:$0xf]
    %v565 = vld [vmem:[#allocation8 + $0x4] sm:$0xf]
    %v566 = vld [vmem:[#allocation8 + $0x8] sm:$0xf]
    %v567 = vld [vmem:[#allocation8 + $0xc] sm:$0xf]
    %v568 = vld [vmem:[#allocation8 + $0x10] sm:$0xf]
    %v569 = vld [vmem:[#allocation8 + $0x14] sm:$0xf]
    %v570 = vld [vmem:[#allocation8 + $0x18] sm:$0xf]
    %v571 = vld [vmem:[#allocation8 + $0x1c] sm:$0xf]
    %v572 = vld [vmem:[#allocation8 + $0x20] sm:$0xf]
    %v573 = vld [vmem:[#allocation8 + $0x24] sm:$0xf]
    %v574 = vld [vmem:[#allocation8 + $0x28] sm:$0xf]
    %v575 = vld [vmem:[#allocation8 + $0x2c] sm:$0xf]
    %v576 = vld [vmem:[#allocation8 + $0x30] sm:$0xf]
    %v577 = vld [vmem:[#allocation8 + $0x34] sm:$0xf]
    %v578 = vld [vmem:[#allocation8 + $0x38] sm:$0xf]
    %v579 = vld [vmem:[#allocation8 + $0x3c] sm:$0xf]
    %v580 = vld [vmem:[%s6] sm:$0x1]
    %v582 = vlaneseq
    %v583 = vshrl.u32 %v582, 7
    %v584 = vsub.s32 0, %v583
    %v585 = vrot.slane %v580, %v584
    %v603 = vunpack.c.l.b16 %v564
    %v604 = vunpack.c.l.b16 %v565
    %v605 = vunpack.c.l.b16 %v566
    %v606 = vunpack.c.l.b16 %v567
    %v607 = vunpack.c.l.b16 %v568
    %v608 = vunpack.c.l.b16 %v569
    %v609 = vunpack.c.l.b16 %v570
    %v610 = vunpack.c.l.b16 %v571
    %v611 = vunpack.c.l.b16 %v572
    %v612 = vunpack.c.l.b16 %v573
    %v613 = vunpack.c.l.b16 %v574
    %v614 = vunpack.c.l.b16 %v575
    %v615 = vunpack.c.l.b16 %v576
    %v616 = vunpack.c.l.b16 %v577
    %v617 = vunpack.c.l.b16 %v578
    %v618 = vunpack.c.l.b16 %v579
    %v619 = vpack.c.b16 %v604, %v603
    %v620 = vpack.c.b16 %v606, %v605
    %v621 = vpack.c.b16 %v608, %v607
    %v622 = vpack.c.b16 %v610, %v609
    %v623 = vpack.c.b16 %v612, %v611
    %v624 = vpack.c.b16 %v614, %v613
    %v625 = vpack.c.b16 %v616, %v615
    %v626 = vpack.c.b16 %v618, %v617
    %635 = vmatprep.subr.bf16.mxu0 0
    %636 = vmatpush1.bf16.msra.mxu0 %v619
    %637 = vmatprep.subr.bf16.mxu0 0
    %638 = vmatpush1.bf16.msra.mxu0 %v620
    %639 = vmatprep.subr.bf16.mxu0 0
    %640 = vmatpush1.bf16.msra.mxu0 %v621
    %641 = vmatprep.subr.bf16.mxu0 0
    %642 = vmatpush1.bf16.msra.mxu0 %v622
    %643 = vmatprep.subr.bf16.mxu0 0
    %644 = vmatpush1.bf16.msra.mxu0 %v623
    %645 = vmatprep.subr.bf16.mxu0 0
    %646 = vmatpush1.bf16.msra.mxu0 %v624
    %647 = vmatprep.subr.bf16.mxu0 0
    %648 = vmatpush1.bf16.msra.mxu0 %v625
    %649 = vmatprep.subr.bf16.mxu0 0
    %650 = vmatpush1.bf16.msra.mxu0 %v626
    %651 = vmatprep.subr.bf16.mxu0 0
    %652 = vmatpush1.bf16.msra.mxu0 0
    %653 = vmatprep.subr.bf16.mxu0 0
    %654 = vmatpush1.bf16.msra.mxu0 0
    %655 = vmatprep.subr.bf16.mxu0 0
    %656 = vmatpush1.bf16.msra.mxu0 0
    %657 = vmatprep.subr.bf16.mxu0 0
    %658 = vmatpush1.bf16.msra.mxu0 0
    %659 = vmatprep.subr.bf16.mxu0 0
    %660 = vmatpush1.bf16.msra.mxu0 0
    %661 = vmatprep.subr.bf16.mxu0 0
    %662 = vmatpush1.bf16.msra.mxu0 0
    %663 = vmatprep.subr.bf16.mxu0 0
    %664 = vmatpush1.bf16.msra.mxu0 0
    %665 = vmatprep.subr.bf16.mxu0 0
    %666 = vmatpush1.bf16.msra.mxu0 0
    %667 = vmatprep.mubr.bf16.mxu0 0
    %668 = vmatmul.mubr.bf16.gmra.mrb[0].mxu0 %v563
    %v669 = vpop.f32.mrb[0].mxu0
    %v670 = vadd.f32 %v585, %v669
    %v671 = vpop.f32.mrb[0].mxu0
    %v672 = vpop.f32.mrb[0].mxu0
    %v673 = vadd.f32 %v585, %v672
    %v674 = vpop.f32.mrb[0].mxu0
    %675 = vdwg.mxu0
    %v676 = vpack.c.bf16 %v673, %v670
    %v678 = vunpack.c.l.b16 %v676
    %v679 = vunpack.c.h.b16 %v676
    %v680 = vpack.c.b16 %v678, %v678
    %v681 = vpack.c.b16 %v679, %v679
    %684 = vst [vmem:[#allocation10] sm:$0xf] %v680
    %685 = vst [vmem:[#allocation10 + $0x4] sm:$0xf] %v681
    // Predicated region
    $region46: #{tpu_custom_call.1} parent=1 // pred_check
      _
    $region47: #{tpu_custom_call.1} parent=1 // pred_check_branch
      %687 = sbr.rel (0) target = $region49
    $region48: #{tpu_custom_call.1} parent=1 // pred_region
      %s689 = ssub.s32 128, 128
      %690 = vsyncadd [#allocation4], %s689
      %s691 = sshll.u32 [#allocation10], 4
      %s692 = int_to_ptr.vmem [resolvable:$true] %s691
      %697 = dma.vmem_to_hbm [thread:$0]  %s692, 128, %s7, [#allocation4], 64, 64, 4
    $region49: #{tpu_custom_call.1} parent=1 // pred_fallthru
      _
    // Predicated region
    $region50: #{tpu_custom_call.1} parent=1 // pred_check
      _
    $region51: #{tpu_custom_call.1} parent=1 // pred_check_branch
      %699 = sbr.rel (0) target = $region53
    $region52: #{tpu_custom_call.1} parent=1 // pred_region
      %700 = dma.done [#allocation4], 128
    $region53: #{tpu_custom_call.1} parent=1 // pred_fallthru
      _
    %701 = vsyncpa [#allocation3], 1
    %702 = vsyncpa [#allocation6], 1
    %703 = vsyncpa [#allocation9], 1
    %704 = vsyncpa [#allocation4], 1

</llo_original>
